<compile_context>
chip_gen: v7x
topology: tpu7x:2x2x1
jax: 0.10.0
libtpu: 0.0.40
codegen_flags: <defaults>
</compile_context>

<pallas_src>
import functools
import math

import jax
import jax.numpy as jnp
from jax.experimental import pallas as pl
from jax.experimental.pallas import tpu as pltpu


def _l_exp_kernel(x_ref, a_ref, bt_ref, o_ref, *, mean_val, compute_dtype):
    """One (batch, row-tile, col-tile) grid step.

    x_ref : (1, 3, TH, TW)     image slab (native dtype, cast in VMEM)
    a_ref : (TH/p, TH)         row-pooling matrix     (grid-constant)
    bt_ref: (TW, TW/p)         column-pooling matrix  (grid-constant)
    o_ref : (1, 1, 1, 1, TW/p) sublane-reduced partial SSE for this tile
    """
    r = x_ref[0, 0].astype(jnp.float32)
    g = x_ref[0, 1].astype(jnp.float32)
    b = x_ref[0, 2].astype(jnp.float32)
    lum = (0.2 * r + 0.7 * g + 0.1 * b).astype(compute_dtype)          # (TH, TW)

    # AvgPool2d(p) == A @ lum @ B^T; both matmuls use the otherwise-idle MXU.
    tmp = jnp.dot(a_ref[...], lum, preferred_element_type=jnp.float32)  # (TH/p, TW)
    pooled = jnp.dot(tmp.astype(compute_dtype), bt_ref[...],
                     preferred_element_type=jnp.float32)                # (TH/p, TW/p)

    diff = pooled - jnp.float32(mean_val)
    # Reduce over sublanes only; the lane reduction + final mean are done once
    # in the wrapper (keeps the per-step store lane-oriented).
    o_ref[...] = jnp.sum(diff * diff, axis=0, keepdims=True)[None, None, None]


def _choose_tiles(h, w, patch_size, itemsize,
                  x_budget_bytes=16 << 20, bt_budget_bytes=8 << 20):
    """Pick (row_tile, col_tile).

    Tiles divide (h, w), are multiples of patch_size, and are sublane(8) /
    lane(128) aligned whenever smaller than the full dimension.  Sized so the
    double-buffered x slab stays under x_budget_bytes and the column-pooling
    matrix under bt_budget_bytes.
    """
    lcm_p8 = patch_size * 8 // math.gcd(patch_size, 8)
    lcm_p128 = patch_size * 128 // math.gcd(patch_size, 128)

    tw_cands = [w] + sorted(
        (d for d in range(lcm_p128, w, lcm_p128) if w % d == 0), reverse=True)

    fallback = None
    for tw in tw_cands:
        th_limit = max(x_budget_bytes // (2 * 3 * tw * itemsize), 1)
        th_cands = ([h] if h <= th_limit else []) + sorted(
            (d for d in range(lcm_p8, min(h, th_limit) + 1, lcm_p8)
             if h % d == 0), reverse=True)
        if not th_cands:
            continue
        cand = (th_cands[0], tw)
        if fallback is None:
            fallback = cand
        if tw * (tw // patch_size) * 4 <= bt_budget_bytes:
            return cand
    # Last resort: whole image per step (always block-shape legal).
    return fallback if fallback is not None else (h, w)


def l_exp(x, patch_size, mean_val, *, tile_rows=None, tile_cols=None,
          compute_dtype=jnp.float32):
    """Pallas implementation of L_exp.forward.  x: (b, 3, h, w), float dtype.

    compute_dtype=jnp.bfloat16 is recommended on v5e (no f32 MXU fast path);
    it slightly reduces accuracy.
    """
    b, c, h, w = x.shape
    assert c == 3, "L_exp expects 3-channel (RGB) input"
    assert h % patch_size == 0 and w % patch_size == 0

    hp, wp = h // patch_size, w // patch_size

    itemsize = jnp.dtype(x.dtype).itemsize
    th, tw = _choose_tiles(h, w, patch_size, itemsize)
    if tile_rows is not None:
        th = tile_rows
    if tile_cols is not None:
        tw = tile_cols
    assert h % th == 0 and th % patch_size == 0
    assert w % tw == 0 and tw % patch_size == 0
    n_row, n_col = h // th, w // tw
    thp, twp = th // patch_size, tw // patch_size

    # Local pooling matrices.  Non-overlapping, tile-aligned pooling means
    # every row/column tile uses the *same* local block -> grid-constant.
    row_ids = jnp.arange(th) // patch_size
    a_local = ((jnp.arange(thp)[:, None] == row_ids[None, :]).astype(jnp.float32)
               / jnp.float32(patch_size)).astype(compute_dtype)        # (TH/p, TH)
    col_ids = jnp.arange(tw) // patch_size
    bt_local = ((col_ids[:, None] == jnp.arange(twp)[None, :]).astype(jnp.float32)
                / jnp.float32(patch_size)).astype(compute_dtype)       # (TW, TW/p)

    kernel = functools.partial(_l_exp_kernel, mean_val=float(mean_val),
                               compute_dtype=compute_dtype)

    cdt_size = jnp.dtype(compute_dtype).itemsize
    vmem_needed = (2 * 3 * th * tw * itemsize      # double-buffered x slab
                   + tw * twp * cdt_size           # B^T (single buffer)
                   + thp * th * cdt_size           # A   (single buffer)
                   + 2 * twp * 4)                  # output blocks
    # Works under v5e's 16 MiB default scoped limit for small tiles, and
    # raises it (capped well below v7x's 64 MiB physical VMEM) for big slabs.
    vmem_limit = int(min(60 << 20, max(32 << 20, 2 * vmem_needed)))

    partials = pl.pallas_call(
        kernel,
        out_shape=jax.ShapeDtypeStruct((b, n_row, n_col, 1, twp), jnp.float32),
        grid_spec=pltpu.PrefetchScalarGridSpec(
            num_scalar_prefetch=0,
            grid=(b, n_row, n_col),
            in_specs=[
                # Image slab: bounded VMEM use, many pipeline steps.
                pl.BlockSpec((1, 3, th, tw), lambda bi, ti, ci: (bi, 0, ti, ci)),
                # Grid-constant pooling matrices: fetched once, single-buffered.
                pl.BlockSpec((thp, th), lambda bi, ti, ci: (0, 0),
                             pipeline_mode=pl.Buffered(1)),
                pl.BlockSpec((tw, twp), lambda bi, ti, ci: (0, 0),
                             pipeline_mode=pl.Buffered(1)),
            ],
            out_specs=pl.BlockSpec((1, 1, 1, 1, twp),
                                   lambda bi, ti, ci: (bi, ti, ci, 0, 0)),
        ),
        compiler_params=pltpu.CompilerParams(
            # Every grid step is independent -> all axes megacore-shardable.
            dimension_semantics=("parallel", "parallel", "parallel"),
            vmem_limit_bytes=vmem_limit,
        ),
        cost_estimate=pl.CostEstimate(
            flops=int(b * h * w * (5 + 2 * thp)),       # lum + pooling matmuls
            transcendentals=0,
            bytes_accessed=int(x.size * itemsize
                               + b * n_row * n_col * twp * 4),
        ),
    )(x, a_local, bt_local)   # x passed in native dtype (no HBM f32 copy)

    return jnp.sum(partials) / jnp.float32(b * hp * wp)


def _l_exp_reference(x, patch_size, mean_val):
    xf = x.astype(jnp.float32)
    lum = 0.2 * xf[:, 0] + 0.7 * xf[:, 1] + 0.1 * xf[:, 2]       # (b, h, w)
    b, h, w = lum.shape
    pooled = lum.reshape(b, h // patch_size, patch_size,
                         w // patch_size, patch_size).mean(axis=(2, 4))
    return jnp.mean((pooled - mean_val) ** 2)


if __name__ == "__main__":
    patch_size = 4
    mean_val = 0.6
    batch, channels, spatial = 2, 3, 16

    key = jax.random.PRNGKey(0)
    x = jax.random.uniform(key, (batch, channels, spatial, spatial),
                           dtype=jnp.float32)

    out = jax.block_until_ready(l_exp(x, patch_size, mean_val))

    ref = _l_exp_reference(x, patch_size, mean_val)
    assert jnp.allclose(out, ref, rtol=1e-5, atol=1e-6), (out, ref)

    print("KERNEL_OK")
</pallas_src>

<mosaic_0001>
module attributes {stable_mosaic.version = 11 : i64} {
  func.func @_l_exp_kernel(%arg0: i32, %arg1: i32, %arg2: i32, %arg3: memref<1x3x16x16xf32, #tpu.memory_space<vmem>>, %arg4: memref<4x16xf32, #tpu.memory_space<vmem>>, %arg5: memref<16x4xf32, #tpu.memory_space<vmem>>, %arg6: memref<1x1x1x1x4xf32, #tpu.memory_space<vmem>>) attributes {dimension_semantics = [#tpu.dimension_semantics<parallel>, #tpu.dimension_semantics<parallel>, #tpu.dimension_semantics<parallel>], iteration_bounds = array<i64: 2, 1, 1>, scalar_prefetch = 0 : i64, scratch_operands = 0 : i64, tpu.core_type = #tpu.core_type<tc>, window_params = [{transform_indices = @transform_0, window_bounds = array<i64: 1, 3, 16, 16>}, {pipeline_mode = #tpu.pipeline_mode<synchronous>, transform_indices = @transform_1, window_bounds = array<i64: 4, 16>}, {pipeline_mode = #tpu.pipeline_mode<synchronous>, transform_indices = @transform_2, window_bounds = array<i64: 16, 4>}, {transform_indices = @transform_3, window_bounds = array<i64: 1, 1, 1, 1, 4>}]} {
    %c0 = arith.constant 0 : index
    %c0_0 = arith.constant 0 : index
    %c0_1 = arith.constant 0 : index
    %c0_2 = arith.constant 0 : index
    %0 = vector.load %arg3[%c0, %c0_0, %c0_1, %c0_2] : memref<1x3x16x16xf32, #tpu.memory_space<vmem>>, vector<1x1x16x16xf32>
    %1 = vector.shape_cast %0 : vector<1x1x16x16xf32> to vector<16x16xf32>
    %c0_3 = arith.constant 0 : index
    %c1 = arith.constant 1 : index
    %c0_4 = arith.constant 0 : index
    %c0_5 = arith.constant 0 : index
    %2 = vector.load %arg3[%c0_3, %c1, %c0_4, %c0_5] : memref<1x3x16x16xf32, #tpu.memory_space<vmem>>, vector<1x1x16x16xf32>
    %3 = vector.shape_cast %2 : vector<1x1x16x16xf32> to vector<16x16xf32>
    %c0_6 = arith.constant 0 : index
    %c2 = arith.constant 2 : index
    %c0_7 = arith.constant 0 : index
    %c0_8 = arith.constant 0 : index
    %4 = vector.load %arg3[%c0_6, %c2, %c0_7, %c0_8] : memref<1x3x16x16xf32, #tpu.memory_space<vmem>>, vector<1x1x16x16xf32>
    %5 = vector.shape_cast %4 : vector<1x1x16x16xf32> to vector<16x16xf32>
    %cst = arith.constant 2.000000e-01 : f32
    %6 = vector.broadcast %cst : f32 to vector<16x16xf32>
    %7 = arith.mulf %6, %1 : vector<16x16xf32>
    %cst_9 = arith.constant 0.699999988 : f32
    %8 = vector.broadcast %cst_9 : f32 to vector<16x16xf32>
    %9 = arith.mulf %8, %3 : vector<16x16xf32>
    %10 = arith.addf %7, %9 : vector<16x16xf32>
    %cst_10 = arith.constant 1.000000e-01 : f32
    %11 = vector.broadcast %cst_10 : f32 to vector<16x16xf32>
    %12 = arith.mulf %11, %5 : vector<16x16xf32>
    %13 = arith.addf %10, %12 : vector<16x16xf32>
    %c0_11 = arith.constant 0 : index
    %c0_12 = arith.constant 0 : index
    %14 = vector.load %arg4[%c0_11, %c0_12] : memref<4x16xf32, #tpu.memory_space<vmem>>, vector<4x16xf32>
    %cst_13 = arith.constant dense<0.000000e+00> : vector<4x16xf32>
    %15 = tpu.matmul %14, %13, %cst_13 {dimension_numbers = #tpu.dot_dimension_numbers<[1], [0], [0], [1], [0, 0, 1, 1], [], []>} : vector<4x16xf32>, vector<16x16xf32>, vector<4x16xf32> -> vector<4x16xf32>
    %c0_14 = arith.constant 0 : index
    %c0_15 = arith.constant 0 : index
    %16 = vector.load %arg5[%c0_14, %c0_15] : memref<16x4xf32, #tpu.memory_space<vmem>>, vector<16x4xf32>
    %cst_16 = arith.constant dense<0.000000e+00> : vector<4x4xf32>
    %17 = tpu.matmul %15, %16, %cst_16 {dimension_numbers = #tpu.dot_dimension_numbers<[1], [0], [0], [1], [0, 0, 1, 1], [], []>} : vector<4x16xf32>, vector<16x4xf32>, vector<4x4xf32> -> vector<4x4xf32>
    %cst_17 = arith.constant 6.000000e-01 : f32
    %18 = vector.broadcast %cst_17 : f32 to vector<4x4xf32>
    %19 = arith.subf %17, %18 : vector<4x4xf32>
    %20 = arith.mulf %19, %19 : vector<4x4xf32>
    %cst_18 = arith.constant dense<0.000000e+00> : vector<4xf32>
    %21 = vector.multi_reduction <add>, %20, %cst_18 [0] : vector<4x4xf32> to vector<4xf32>
    %22 = vector.shape_cast %21 : vector<4xf32> to vector<1x4xf32>
    %23 = vector.shape_cast %22 : vector<1x4xf32> to vector<1x1x1x1x4xf32>
    %c0_19 = arith.constant 0 : index
    %c0_20 = arith.constant 0 : index
    %c0_21 = arith.constant 0 : index
    %c0_22 = arith.constant 0 : index
    %c0_23 = arith.constant 0 : index
    %24 = vector.load %arg6[%c0_19, %c0_20, %c0_21, %c0_22, %c0_23] : memref<1x1x1x1x4xf32, #tpu.memory_space<vmem>>, vector<1x1x1x1x4xf32>
    tpu.vector_store %arg6[%c0_19, %c0_20, %c0_21, %c0_22, %c0_23], %23 {strides = array<i32>} : memref<1x1x1x1x4xf32, #tpu.memory_space<vmem>>, vector<1x1x1x1x4xf32>,
    return
  }
  func.func @transform_0(%arg0: i32, %arg1: i32, %arg2: i32) -> (i32, i32, i32, i32) {
    %c0_i32 = arith.constant 0 : i32
    %c0_i32_0 = arith.constant 0 : i32
    return %arg0, %c0_i32, %arg1, %arg2 : i32, i32, i32, i32
  }
  func.func @transform_1(%arg0: i32, %arg1: i32, %arg2: i32) -> (i32, i32) {
    %c0_i32 = arith.constant 0 : i32
    %c0_i32_0 = arith.constant 0 : i32
    %c0_i32_1 = arith.constant 0 : i32
    return %c0_i32, %c0_i32_0 : i32, i32
  }
  func.func @transform_2(%arg0: i32, %arg1: i32, %arg2: i32) -> (i32, i32) {
    %c0_i32 = arith.constant 0 : i32
    %c0_i32_0 = arith.constant 0 : i32
    %c0_i32_1 = arith.constant 0 : i32
    return %c0_i32, %c0_i32_0 : i32, i32
  }
  func.func @transform_3(%arg0: i32, %arg1: i32, %arg2: i32) -> (i32, i32, i32, i32, i32) {
    %c0_i32 = arith.constant 0 : i32
    %c0_i32_0 = arith.constant 0 : i32
    %c0_i32_1 = arith.constant 0 : i32
    return %arg0, %arg1, %arg2, %c0_i32, %c0_i32_0 : i32, i32, i32, i32, i32
  }
}

</mosaic_0001>

<llo_original>
// kernel: tpu_custom_call.1
$region0: #{tpu_custom_call.1}
  #allocation0 [shape = 'u32[]', space=smem, size = 0x4, offset = 0x4, fixed_abs, tag = 'smem constant byte address 0x4 - core index']
  #allocation1 [shape = 'u32[144,128]{1,0:T(1,128)}', space=vmem, size = 0x12000, scoped, tag = 'internal scratch']
  %s0 = inlined_call_operand.hbm [shape: f32[2,3,16,16], index: 0, kind: input, shape index: {}]
  %s1 = inlined_call_operand.vmem [shape: f32[4,16], index: 1, kind: input, shape index: {}]
  %s2 = inlined_call_operand.vmem [shape: f32[16,4], index: 2, kind: input, shape index: {}]
  %s3 = inlined_call_operand.hbm [shape: f32[2,1,1,1,4], index: 3, kind: output, shape index: {}]
  %s4 = sld [smem:[#allocation0]]
  $region49: #{tpu_custom_call.1} parent=0
    _
  %s6 = ssub.s32 1, %s4
  %s7 = scalar_select 0, %s6, %s4
  $region1: #{tpu_custom_call.1} parent=0
    #allocation2 [shape = 'u8[49152]{0}', space=vmem, size = 0xc000, scoped, tag = 'input window, operand 0']
    #allocation3 [shape = 's32[2]{0}', space=sflag, size = 0x8, scoped, tag = 'scoped memory for tpu_custom_call.1']
    #allocation4 [shape = 's32[2]{0}', space=sflag, size = 0x8, scoped, tag = 'scoped memory for tpu_custom_call.1']
    #allocation5 [shape = 'u8[1024]{0}', space=vmem, size = 0x400, scoped, tag = 'output window, operand 0']
    %8 = vsyncpa [#allocation3], 0
    %s9 = scalar_lea.sflag [#allocation3], 1
    %10 = vsyncpa %s9, 0
    %11 = vsyncpa [#allocation4], 0
    %s12 = scalar_lea.sflag [#allocation4], 1
    %13 = vsyncpa %s12, 0
    loop: start=0, step=1, limit=4
    $region2: #{tpu_custom_call.1} parent=1 // loop_pre_header
      _
    $region3: #{tpu_custom_call.1} parent=1 // loop_header
      %s15 = sphi 0, %s19
      %p16 = scmp.ge.s32.totalorder %s15, 4
      %s22 = sphi 0, %s41
      %s23 = sphi 0, %s37
      %s24 = sphi 0, %s33
      %s25 = sphi 0, %s22
      %s26 = sphi 0, %s23
      %s27 = sphi 0, %s24
      %s28 = sphi 0, %s25
      %s29 = sphi 0, %s26
      %s30 = sphi 0, %s27
      %s48 = sphi 0, %s50
      %s51 = sphi 0, %s48
      %s52 = sphi 0, %s51
      %s68 = sphi 0, %s52
      %s72 = sphi 0, %s72
      %s74 = sphi 0, %s72
      %s75 = sphi 0, %s74
      %s89 = sphi 0, %s75
      %s93 = sphi 0, %s93
      %s95 = sphi 0, %s93
      %s96 = sphi 0, %s95
      %s110 = sphi 0, %s96
      %s120 = sphi 0, %s122
      %s123 = sphi 0, %s120
      %s124 = sphi 0, %s123
      %s140 = sphi 0, %s124
    $region4: #{tpu_custom_call.1} parent=1 // loop_header_branch
      %18 = sbr.rel (%p16) target = $region8
    $region5: #{tpu_custom_call.1} parent=1 // loop_body
      %s20 = ssub.s32 %s15, 1
      %s21 = ssub.s32 %s15, 2
      %s31 = sadd.s32 1, %s24
      %p32 = scmp.ge.s32.totalorder %s31, 1
      %s33 = scalar_select %p32, 0, %s31
      %s34 = sadd.s32 1, %s23
      %s35 = scalar_select %p32, %s34, %s23
      %p36 = scmp.ge.s32.totalorder %s35, 1
      %s37 = scalar_select %p36, 0, %s35
      %s38 = sadd.s32 1, %s22
      %s39 = scalar_select %p36, %s38, %s22
      %p40 = scmp.ge.s32.totalorder %s39, 2
      %s41 = scalar_select %p40, 0, %s39
      %s42 = ssub.s32 %s22, %s41
      %s43 = ssub.s32 %s23, %s37
      %s44 = sor.u32 %s42, %s43
      %s45 = ssub.s32 %s24, %s33
      %s46 = sor.u32 %s44, %s45
      %p47 = scmp.eq.s32.totalorder %s46, 0
      %s49 = sadd.s32 %s48, 1
      %s50 = scalar_select %p47, %s48, %s49
      %p53 = pneg %p47
      %p54 = scmp.eq.s32.totalorder %s15, 1
      %p55 = por %p53, %p54
      %p56 = scmp.ne.s32.totalorder %s48, %s51
      %p57 = scmp.eq.s32.totalorder %s15, 0
      %p58 = por %p56, %p57
      %p59 = scmp.ne.s32.totalorder %s48, %s51
      %p60 = scmp.eq.s32.totalorder %s20, 1
      %p61 = por %p59, %p60
      %p62 = scmp.ne.s32.totalorder %s51, %s52
      %p63 = scmp.eq.s32.totalorder %s20, 0
      %p64 = por %p62, %p63
      %p65 = scmp.ne.s32.totalorder %s51, %s52
      %p66 = scmp.eq.s32.totalorder %s21, 1
      %p67 = por %p65, %p66
      %p69 = scmp.ne.s32.totalorder %s52, %s68
      %p70 = scmp.eq.s32.totalorder %s21, 0
      %p71 = por %p69, %p70
      %s73 = sadd.s32 %s72, 1
      %p76 = scmp.eq.s32.totalorder %s15, 1
      %p77 = scmp.ne.s32.totalorder %s72, %s74
      %p78 = scmp.eq.s32.totalorder %s15, 0
      %p79 = por %p77, %p78
      %p80 = scmp.ne.s32.totalorder %s72, %s74
      %p81 = scmp.eq.s32.totalorder %s20, 1
      %p82 = por %p80, %p81
      %p83 = scmp.ne.s32.totalorder %s74, %s75
      %p84 = scmp.eq.s32.totalorder %s20, 0
      %p85 = por %p83, %p84
      %p86 = scmp.ne.s32.totalorder %s74, %s75
      %p87 = scmp.eq.s32.totalorder %s21, 1
      %p88 = por %p86, %p87
      %p90 = scmp.ne.s32.totalorder %s75, %s89
      %p91 = scmp.eq.s32.totalorder %s21, 0
      %p92 = por %p90, %p91
      %s94 = sadd.s32 %s93, 1
      %p97 = scmp.eq.s32.totalorder %s15, 1
      %p98 = scmp.ne.s32.totalorder %s93, %s95
      %p99 = scmp.eq.s32.totalorder %s15, 0
      %p100 = por %p98, %p99
      %p101 = scmp.ne.s32.totalorder %s93, %s95
      %p102 = scmp.eq.s32.totalorder %s20, 1
      %p103 = por %p101, %p102
      %p104 = scmp.ne.s32.totalorder %s95, %s96
      %p105 = scmp.eq.s32.totalorder %s20, 0
      %p106 = por %p104, %p105
      %p107 = scmp.ne.s32.totalorder %s95, %s96
      %p108 = scmp.eq.s32.totalorder %s21, 1
      %p109 = por %p107, %p108
      %p111 = scmp.ne.s32.totalorder %s96, %s110
      %p112 = scmp.eq.s32.totalorder %s21, 0
      %p113 = por %p111, %p112
      %s114 = ssub.s32 %s22, %s41
      %s115 = ssub.s32 %s23, %s37
      %s116 = sor.u32 %s114, %s115
      %s117 = ssub.s32 %s24, %s33
      %s118 = sor.u32 %s116, %s117
      %p119 = scmp.eq.s32.totalorder %s118, 0
      %s121 = sadd.s32 %s120, 1
      %s122 = scalar_select %p119, %s120, %s121
      %p125 = pneg %p119
      %p126 = scmp.eq.s32.totalorder %s15, 1
      %p127 = por %p125, %p126
      %p128 = scmp.ne.s32.totalorder %s120, %s123
      %p129 = scmp.eq.s32.totalorder %s15, 0
      %p130 = por %p128, %p129
      %p131 = scmp.ne.s32.totalorder %s120, %s123
      %p132 = scmp.eq.s32.totalorder %s20, 1
      %p133 = por %p131, %p132
      %p134 = scmp.ne.s32.totalorder %s123, %s124
      %p135 = scmp.eq.s32.totalorder %s20, 0
      %p136 = por %p134, %p135
      %p137 = scmp.ne.s32.totalorder %s123, %s124
      %p138 = scmp.eq.s32.totalorder %s21, 1
      %p139 = por %p137, %p138
      %p141 = scmp.ne.s32.totalorder %s124, %s140
      %p142 = scmp.eq.s32.totalorder %s21, 0
      %p143 = por %p141, %p142
      %p144 = scmp.le.s32.totalorder 1, %s15
      %p145 = scmp.lt.s32.totalorder %s15, 3
      %p146 = pnand %p144, %p145
      %p147 = pneg %p146
      // Predicated region
      $region9: #{tpu_custom_call.1} parent=5 // pred_check
        _
      $region10: #{tpu_custom_call.1} parent=5 // pred_check_branch
        %149 = sbr.rel (%p146) target = $region12
      $region11: #{tpu_custom_call.1} parent=5 // pred_region
        %s150 = ssub.s32 %s15, 1
        // Predicated region
        $region13: #{tpu_custom_call.1} parent=11 // pred_check
          %p151 = pneg %p85
        $region14: #{tpu_custom_call.1} parent=11 // pred_check_branch
          %153 = sbr.rel (%p151) target = $region16
        $region15: #{tpu_custom_call.1} parent=11 // pred_region
          _
        $region16: #{tpu_custom_call.1} parent=11 // pred_fallthru
          _
        // Predicated region
        $region17: #{tpu_custom_call.1} parent=11 // pred_check
          %p154 = pneg %p106
        $region18: #{tpu_custom_call.1} parent=11 // pred_check_branch
          %156 = sbr.rel (%p154) target = $region20
        $region19: #{tpu_custom_call.1} parent=11 // pred_region
          _
        $region20: #{tpu_custom_call.1} parent=11 // pred_fallthru
          _
      $region12: #{tpu_custom_call.1} parent=5 // pred_fallthru
        _
      %p157 = scmp.lt.s32.totalorder %s15, 2
      // Predicated region
      $region21: #{tpu_custom_call.1} parent=5 // pred_check
        %p158 = pneg %p157
      $region22: #{tpu_custom_call.1} parent=5 // pred_check_branch
        %160 = sbr.rel (%p158) target = $region24
      $region23: #{tpu_custom_call.1} parent=5 // pred_region
        // Predicated region
        $region25: #{tpu_custom_call.1} parent=23 // pred_check
          %p161 = pneg %p58
        $region26: #{tpu_custom_call.1} parent=23 // pred_check_branch
          %163 = sbr.rel (%p161) target = $region28
        $region27: #{tpu_custom_call.1} parent=23 // pred_region
          %s164 = sand.u32 %s48, 1
          %s165 = scalar_lea.sflag [#allocation3], %s164
          %s166 = sand.u32 %s48, 1
          %s167 = smul.addr %s166, 48
          %s168 = scalar_lea.vmem [#allocation2], %s167
          %s169 = smul.u32 2, %s23
          %s171 = ssub.s32 768, 768
          %172 = vsyncadd %s165, %s171
          %s173 = sadd.s32 %s24, %s169
          %s174 = smul.addr %s22, 6
          %s175 = sadd.s32 %s173, %s174
          %s176 = smul.addr %s175, 128
          %s177 = scalar_lea.hbm %s0, %s176
          %s178 = sshll.u32 %s168, 4
          %s179 = int_to_ptr.vmem [resolvable:$true] %s178
          %184 = dma.hbm_to_vmem [thread:$0]  %s177, 768, %s179, %s165, 128, 128, 8
        $region28: #{tpu_custom_call.1} parent=23 // pred_fallthru
          _
      $region24: #{tpu_custom_call.1} parent=5 // pred_fallthru
        _
      %p185 = scmp.le.s32.totalorder 1, %s15
      %p186 = scmp.lt.s32.totalorder %s15, 3
      %p187 = pnand %p185, %p186
      %p188 = pneg %p187
      // Predicated region
      $region29: #{tpu_custom_call.1} parent=5 // pred_check
        _
      $region30: #{tpu_custom_call.1} parent=5 // pred_check_branch
        %190 = sbr.rel (%p187) target = $region32
      $region31: #{tpu_custom_call.1} parent=5 // pred_region
        %s191 = ssub.s32 %s15, 1
        %s192 = sand.u32 %s51, 1
        %s193 = scalar_lea.sflag [#allocation3], %s192
        %s194 = sand.u32 %s51, 1
        %s195 = smul.addr %s194, 48
        %s196 = scalar_lea.vmem [#allocation2], %s195
        // Predicated region
        $region33: #{tpu_custom_call.1} parent=31 // pred_check
          %p197 = pneg %p64
        $region34: #{tpu_custom_call.1} parent=31 // pred_check_branch
          %199 = sbr.rel (%p197) target = $region36
        $region35: #{tpu_custom_call.1} parent=31 // pred_region
          %200 = dma.done %s193, 768
        $region36: #{tpu_custom_call.1} parent=31 // pred_fallthru
          _
        %s201 = sand.u32 %s51, 1
        %s202 = scalar_lea.sflag [#allocation3], %s201
        %s203 = sand.u32 %s51, 1
        %s204 = smul.addr %s203, 48
        %s205 = scalar_lea.vmem [#allocation2], %s204
        %p206 = pneg %p64
        %p207 = pneg %p61
        %p208 = pneg %p85
        %p209 = pneg %p82
        %p210 = pneg %p106
        %p211 = pneg %p103
        %p212 = pneg %p136
        %p213 = pneg %p133
        %s214 = sand.u32 %s123, 1
        %s215 = scalar_lea.sflag [#allocation4], %s214
        %s216 = sand.u32 %s123, 1
        %s217 = scalar_lea.vmem [#allocation5], %s216
        %s218 = smul.u32 2, %s26
        %v219 = vld [vmem:[%s196] sm:$0xff]
        %v220 = vld [vmem:[%s196 + $0x8] sm:$0xff]
        %s221 = scalar_lea.vmem %s196, 16 [#allocation2]
        %v222 = vld [vmem:[%s221] sm:$0xff]
        %v223 = vld [vmem:[%s221 + $0x8] sm:$0xff]
        %s224 = scalar_lea.vmem %s196, 32 [#allocation2]
        %v225 = vld [vmem:[%s224] sm:$0xff]
        %v226 = vld [vmem:[%s224 + $0x8] sm:$0xff]
        %v227 = vmul.f32 %v219, 0.2
        %v228 = vmul.f32 %v220, 0.2
        %v229 = vmul.f32 %v222, 0.7
        %v230 = vmul.f32 %v223, 0.7
        %v231 = vadd.f32 %v227, %v229
        %v232 = vadd.f32 %v228, %v230
        %v233 = vmul.f32 %v225, 0.1
        %v234 = vmul.f32 %v226, 0.1
        %v235 = vadd.f32 %v231, %v233
        %v236 = vadd.f32 %v232, %v234
        %v237 = vld [vmem:[%s1] sm:$0xf]
        %vm238 = vcmask 130048
        %v240 = vsel %vm238, %v237, 0
        %242 = vmatprep.subr.mxu0 0.0
        %243 = vmatpush1.msra.mxu0 %v235
        %244 = vmatprep.subr.mxu0 0.0
        %245 = vmatpush1.msra.mxu0 %v236
        %246 = vmatprep.subr.mxu0 0.0
        %247 = vmatpush1.msra.mxu0 0.0
        %248 = vmatprep.subr.mxu0 0.0
        %249 = vmatpush1.msra.mxu0 0.0
        %250 = vmatprep.subr.mxu0 0.0
        %251 = vmatpush1.msra.mxu0 0.0
        %252 = vmatprep.subr.mxu0 0.0
        %253 = vmatpush1.msra.mxu0 0.0
        %254 = vmatprep.subr.mxu0 0.0
        %255 = vmatpush1.msra.mxu0 0.0
        %256 = vmatprep.subr.mxu0 0.0
        %257 = vmatpush1.msra.mxu0 0.0
        %258 = vmatprep.subr.mxu0 0.0
        %259 = vmatpush1.msra.mxu0 0.0
        %260 = vmatprep.subr.mxu0 0.0
        %261 = vmatpush1.msra.mxu0 0.0
        %262 = vmatprep.subr.mxu0 0.0
        %263 = vmatpush1.msra.mxu0 0.0
        %264 = vmatprep.subr.mxu0 0.0
        %265 = vmatpush1.msra.mxu0 0.0
        %266 = vmatprep.subr.mxu0 0.0
        %267 = vmatpush1.msra.mxu0 0.0
        %268 = vmatprep.subr.mxu0 0.0
        %269 = vmatpush1.msra.mxu0 0.0
        %270 = vmatprep.subr.mxu0 0.0
        %271 = vmatpush1.msra.mxu0 0.0
        %272 = vmatprep.subr.mxu0 0.0
        %273 = vmatpush1.msra.mxu0 0.0
        %274 = vmatprep.subr.mxu0 0.0
        %275 = vmatpush1.msra.mxu0 0.0
        %276 = vmatprep.subr.mxu0 0.0
        %277 = vmatpush1.msra.mxu0 0.0
        %278 = vmatprep.subr.mxu0 0.0
        %279 = vmatpush1.msra.mxu0 0.0
        %280 = vmatprep.subr.mxu0 0.0
        %281 = vmatpush1.msra.mxu0 0.0
        %282 = vmatprep.subr.mxu0 0.0
        %283 = vmatpush1.msra.mxu0 0.0
        %284 = vmatprep.subr.mxu0 0.0
        %285 = vmatpush1.msra.mxu0 0.0
        %286 = vmatprep.subr.mxu0 0.0
        %287 = vmatpush1.msra.mxu0 0.0
        %288 = vmatprep.subr.mxu0 0.0
        %289 = vmatpush1.msra.mxu0 0.0
        %290 = vmatprep.subr.mxu0 0.0
        %291 = vmatpush1.msra.mxu0 0.0
        %292 = vmatprep.subr.mxu0 0.0
        %293 = vmatpush1.msra.mxu0 0.0
        %294 = vmatprep.subr.mxu0 0.0
        %295 = vmatpush1.msra.mxu0 0.0
        %296 = vmatprep.subr.mxu0 0.0
        %297 = vmatpush1.msra.mxu0 0.0
        %298 = vmatprep.subr.mxu0 0.0
        %299 = vmatpush1.msra.mxu0 0.0
        %300 = vmatprep.subr.mxu0 0.0
        %301 = vmatpush1.msra.mxu0 0.0
        %302 = vmatprep.subr.mxu0 0.0
        %303 = vmatpush1.msra.mxu0 0.0
        %304 = vmatprep.subr.mxu0 0.0
        %305 = vmatpush1.msra.mxu0 0.0
        %306 = vmatprep.mubr.f32.mxu0 0.0
        %307 = vmatmul.mubr.f32.gmra.mrb[0].mxu0 %v240
        %v308 = vpop.f32.mrb[0].mxu0
        %v309 = vadd.f32 0.0, %v308
        %v310 = vpop.f32.mrb[0].mxu0
        %311 = vdwg.mxu0
        %v312 = vld [vmem:[%s2] sm:$0xff]
        %v313 = vld [vmem:[%s2 + $0x8] sm:$0xff]
        %v315 = vsel %vm238, %v309, 0
        %317 = vmatprep.subr.mxu0 0.0
        %318 = vmatpush1.msra.mxu0 %v312
        %319 = vmatprep.subr.mxu0 0.0
        %320 = vmatpush1.msra.mxu0 %v313
        %321 = vmatprep.subr.mxu0 0.0
        %322 = vmatpush1.msra.mxu0 0.0
        %323 = vmatprep.subr.mxu0 0.0
        %324 = vmatpush1.msra.mxu0 0.0
        %325 = vmatprep.subr.mxu0 0.0
        %326 = vmatpush1.msra.mxu0 0.0
        %327 = vmatprep.subr.mxu0 0.0
        %328 = vmatpush1.msra.mxu0 0.0
        %329 = vmatprep.subr.mxu0 0.0
        %330 = vmatpush1.msra.mxu0 0.0
        %331 = vmatprep.subr.mxu0 0.0
        %332 = vmatpush1.msra.mxu0 0.0
        %333 = vmatprep.subr.mxu0 0.0
        %334 = vmatpush1.msra.mxu0 0.0
        %335 = vmatprep.subr.mxu0 0.0
        %336 = vmatpush1.msra.mxu0 0.0
        %337 = vmatprep.subr.mxu0 0.0
        %338 = vmatpush1.msra.mxu0 0.0
        %339 = vmatprep.subr.mxu0 0.0
        %340 = vmatpush1.msra.mxu0 0.0
        %341 = vmatprep.subr.mxu0 0.0
        %342 = vmatpush1.msra.mxu0 0.0
        %343 = vmatprep.subr.mxu0 0.0
        %344 = vmatpush1.msra.mxu0 0.0
        %345 = vmatprep.subr.mxu0 0.0
        %346 = vmatpush1.msra.mxu0 0.0
        %347 = vmatprep.subr.mxu0 0.0
        %348 = vmatpush1.msra.mxu0 0.0
        %349 = vmatprep.subr.mxu0 0.0
        %350 = vmatpush1.msra.mxu0 0.0
        %351 = vmatprep.subr.mxu0 0.0
        %352 = vmatpush1.msra.mxu0 0.0
        %353 = vmatprep.subr.mxu0 0.0
        %354 = vmatpush1.msra.mxu0 0.0
        %355 = vmatprep.subr.mxu0 0.0
        %356 = vmatpush1.msra.mxu0 0.0
        %357 = vmatprep.subr.mxu0 0.0
        %358 = vmatpush1.msra.mxu0 0.0
        %359 = vmatprep.subr.mxu0 0.0
        %360 = vmatpush1.msra.mxu0 0.0
        %361 = vmatprep.subr.mxu0 0.0
        %362 = vmatpush1.msra.mxu0 0.0
        %363 = vmatprep.subr.mxu0 0.0
        %364 = vmatpush1.msra.mxu0 0.0
        %365 = vmatprep.subr.mxu0 0.0
        %366 = vmatpush1.msra.mxu0 0.0
        %367 = vmatprep.subr.mxu0 0.0
        %368 = vmatpush1.msra.mxu0 0.0
        %369 = vmatprep.subr.mxu0 0.0
        %370 = vmatpush1.msra.mxu0 0.0
        %371 = vmatprep.subr.mxu0 0.0
        %372 = vmatpush1.msra.mxu0 0.0
        %373 = vmatprep.subr.mxu0 0.0
        %374 = vmatpush1.msra.mxu0 0.0
        %375 = vmatprep.subr.mxu0 0.0
        %376 = vmatpush1.msra.mxu0 0.0
        %377 = vmatprep.subr.mxu0 0.0
        %378 = vmatpush1.msra.mxu0 0.0
        %379 = vmatprep.subr.mxu0 0.0
        %380 = vmatpush1.msra.mxu0 0.0
        %381 = vmatprep.mubr.f32.mxu0 0.0
        %382 = vmatmul.mubr.f32.gmra.mrb[0].mxu0 %v315
        %v383 = vpop.f32.mrb[0].mxu0
        %v384 = vadd.f32 0.0, %v383
        %v385 = vpop.f32.mrb[0].mxu0
        %386 = vdwg.mxu0
        %v387 = vsub.f32 %v384, 0.6
        %v388 = vmul.f32 %v387, %v387
        %vm389 = vcmask 27648
        %v390 = vsel %vm389, %v388, 0.0
        %v391 = vrot.slane %v390, 4
        %v392 = vadd.f32 %v390, %v391
        %v393 = vrot.slane %v392, 2
        %v394 = vadd.f32 %v392, %v393
        %v395 = vrot.slane %v394, 1
        %v396 = vadd.f32 %v394, %v395
        %vm397 = vcmask 24576
        %398 = vst.msk [vmem:[%s217] sm:$0x1] %vm397, %v396
        %s399 = sand.u32 %s123, 1
        %s400 = scalar_lea.sflag [#allocation4], %s399
        %s401 = sand.u32 %s123, 1
        %s402 = scalar_lea.vmem [#allocation5], %s401
        // Predicated region
        $region37: #{tpu_custom_call.1} parent=31 // pred_check
          %p403 = pneg %p133
        $region38: #{tpu_custom_call.1} parent=31 // pred_check_branch
          %405 = sbr.rel (%p403) target = $region40
        $region39: #{tpu_custom_call.1} parent=31 // pred_region
          %s407 = ssub.s32 16, 16
          %408 = vsyncadd %s400, %s407
          %s409 = sadd.s32 %s27, %s26
          %s410 = sadd.s32 %s409, %s25
          %s411 = smul.addr %s410, 16
          %s412 = scalar_lea.hbm %s3, %s411
          %s414 = sshll.u32 %s402, 4
          %s415 = int_to_ptr.vmem [resolvable:$true] %s414
          %417 = dma.vmem_to_hbm [thread:$0]  %s415, 16, %s412, %s400
        $region40: #{tpu_custom_call.1} parent=31 // pred_fallthru
          _
      $region32: #{tpu_custom_call.1} parent=5 // pred_fallthru
        _
      %p418 = scmp.le.s32.totalorder 2, %s15
      // Predicated region
      $region41: #{tpu_custom_call.1} parent=5 // pred_check
        %p419 = pneg %p418
      $region42: #{tpu_custom_call.1} parent=5 // pred_check_branch
        %421 = sbr.rel (%p419) target = $region44
      $region43: #{tpu_custom_call.1} parent=5 // pred_region
        %s422 = ssub.s32 %s15, 2
        // Predicated region
        $region45: #{tpu_custom_call.1} parent=43 // pred_check
          %p423 = pneg %p139
        $region46: #{tpu_custom_call.1} parent=43 // pred_check_branch
          %425 = sbr.rel (%p423) target = $region48
        $region47: #{tpu_custom_call.1} parent=43 // pred_region
          %s426 = sand.u32 %s124, 1
          %s427 = scalar_lea.sflag [#allocation4], %s426
          %s428 = sand.u32 %s124, 1
          %s429 = scalar_lea.vmem [#allocation5], %s428
          %430 = dma.done %s427, 16
        $region48: #{tpu_custom_call.1} parent=43 // pred_fallthru
          _
      $region44: #{tpu_custom_call.1} parent=5 // pred_fallthru
        _
    $region6: #{tpu_custom_call.1} parent=1 // loop_footer
      %s19 = sadd.s32 1, %s15
    $region7: #{tpu_custom_call.1} parent=1 // loop_footer_branch
      %14 = sbr.rel target = $region3
    $region8: #{tpu_custom_call.1} parent=1 // loop_exit
      _
    %431 = vsyncpa [#allocation3], 1
    %s432 = scalar_lea.sflag [#allocation3], 1
    %433 = vsyncpa %s432, 1
    %434 = vsyncpa [#allocation4], 1
    %s435 = scalar_lea.sflag [#allocation4], 1
    %436 = vsyncpa %s435, 1

</llo_original>
